<compile_context>
chip_gen: v5e
topology: v5e:2x2
jax: 0.10.0
libtpu: 0.0.40
codegen_flags: <defaults>
</compile_context>

<pallas_src>
import functools

import jax
import jax.numpy as jnp
from jax import lax
from jax.experimental import pallas as pl
from jax.experimental.pallas import tpu as pltpu


# ----------------------------------------------------------------------------
# Kernel 1: parameter head (Linear+ReLU -> sigmoid/tanh heads)
# ----------------------------------------------------------------------------
def _param_head_kernel(para_ref, wc_ref, bc_ref, ws_ref, bs_ref, wr_ref, br_ref,
                       wt_ref, bt_ref, scale_ref, angle_ref, trans_ref):
    x = para_ref[...]                                                    # (B, P)
    h = jnp.dot(x, wc_ref[...], preferred_element_type=jnp.float32) + bc_ref[...]
    h = jnp.maximum(h, 0.0)                                              # ReLU

    s = jnp.dot(h, ws_ref[...], preferred_element_type=jnp.float32) + bs_ref[...]
    scale_ref[...] = 2.0 / (1.0 + jnp.exp(-s))                           # sigmoid * 2

    r = jnp.dot(h, wr_ref[...], preferred_element_type=jnp.float32) + br_ref[...]
    angle_ref[...] = jnp.tanh(r) * 3.14159                               # tanh * pi

    t = jnp.dot(h, wt_ref[...], preferred_element_type=jnp.float32) + bt_ref[...]
    trans_ref[...] = jnp.tanh(t)                                         # tanh


def param_head(para_code, w):
    B, P = para_code.shape
    C = w["w_scale"].shape[0]
    args = (
        para_code.astype(jnp.float32),
        w["w_common"].T.astype(jnp.float32),
        w["b_common"].reshape(1, P).astype(jnp.float32),
        w["w_scale"].T.astype(jnp.float32),
        w["b_scale"].reshape(1, C).astype(jnp.float32),
        w["w_rotation"].T.astype(jnp.float32),
        w["b_rotation"].reshape(1, C).astype(jnp.float32),
        w["w_translation"].T.astype(jnp.float32),
        w["b_translation"].reshape(1, 2 * C).astype(jnp.float32),
    )
    return pl.pallas_call(
        _param_head_kernel,
        out_shape=(jax.ShapeDtypeStruct((B, C), jnp.float32),
                   jax.ShapeDtypeStruct((B, C), jnp.float32),
                   jax.ShapeDtypeStruct((B, 2 * C), jnp.float32)),
        in_specs=[pl.BlockSpec(memory_space=pltpu.MemorySpace.VMEM)] * 9,
        out_specs=(pl.BlockSpec(memory_space=pltpu.MemorySpace.VMEM),) * 3,
    )(*args)


# ----------------------------------------------------------------------------
# Kernel 2: per-(batch, channel-block) affine warp + trilinear grid_sample
# ----------------------------------------------------------------------------
def _adaat_warp_kernel(coef_ref, zidx_ref, vol_ref, out_ref, *, H, W, C, CBLK):
    b = pl.program_id(0)
    cb = pl.program_id(1)
    N = H * W

    # Grid/channel-invariant index machinery, hoisted out of the channel loop.
    # All position arrays are lane-dense: pixels n = y*W + x on the lane axis.
    n_f = lax.broadcasted_iota(jnp.int32, (1, N), 1).astype(jnp.float32)
    yf = jnp.floor((n_f + 0.5) * (1.0 / W))      # +0.5 guards the inexact 1/W
    xf = n_f - yf * W
    col = lax.broadcasted_iota(jnp.int32, (W, N), 0).astype(jnp.float32)
    row = lax.broadcasted_iota(jnp.int32, (H, N), 0).astype(jnp.float32)

    for i in range(CBLK):                         # static unroll, CBLK is small
        cg = cb * CBLK + i                        # global channel index
        p = b * C + cg                            # flat (b, c) index

        # per-(b, c) affine coefficients and z-blend weights from SMEM
        ax = coef_ref[0, p]
        ay = coef_ref[1, p]
        a0 = coef_ref[2, p]
        bx = coef_ref[3, p]
        by = coef_ref[4, p]
        b0 = coef_ref[5, p]
        wz0 = coef_ref[6, p]
        wz1 = coef_ref[7, p]
        z0 = zidx_ref[0, cg]
        z1 = zidx_ref[1, cg]

        # In-plane sample positions are identical for both z neighbours, so
        # blend the two z planes first (feature volume resident in VMEM).
        plane = wz0 * vol_ref[z0] + wz1 * vol_ref[z1]            # (H, W) f32
        plane_t = jnp.transpose(plane).astype(jnp.bfloat16)      # (W, H) bf16

        # ix/iy = pre-folded affine of the pixel coordinates (2 FMAs each);
        # equals grid build + rotation*scale+translation + grid_sample
        # unnormalization (align_corners=False).
        ix = ax * xf + ay * yf + a0                              # (1, N)
        iy = bx * xf + by * yf + b0                              # (1, N)
        x0 = jnp.floor(ix)
        fx = ix - x0
        y0 = jnp.floor(iy)
        fy = iy - y0

        # Bilinear one-hot weights; out-of-range corners never match any index,
        # which reproduces padding_mode='zeros'.
        wx = (jnp.where(col == x0, 1.0 - fx, 0.0) +
              jnp.where(col == x0 + 1.0, fx, 0.0))               # (W, N)
        wy = (jnp.where(row == y0, 1.0 - fy, 0.0) +
              jnp.where(row == y0 + 1.0, fy, 0.0))               # (H, N)

        # Gather-free bilinear sample: row interpolation on the MXU (bf16
        # operands, f32 accumulation), column interpolation as sublane reduce.
        rows_t = jnp.dot(plane_t, wy.astype(jnp.bfloat16),
                         preferred_element_type=jnp.float32)     # (W, N)
        val = jnp.sum(rows_t * wx, axis=0, keepdims=True)        # (1, N)

        out_ref[pl.ds(i, 1), :] = val.astype(out_ref.dtype)      # lane-dense vst


def adaat_warp(feature_map, cos_t, sin_t, scale, trans):
    """feature_map (B, D, H, W); cos/sin/scale (B, C); trans (B, C, 2); C == D."""
    B, D, H, W = feature_map.shape
    C = cos_t.shape[1]
    assert C == D, "AdaAT requires feature_ch == depth of the feature map"
    N = H * W

    # Static per-channel z interpolation: grid_z depends only on the channel.
    cz = jnp.arange(C, dtype=jnp.float32)
    gz = 2.0 * cz / (D - 1.0) - 1.0
    iz = ((gz + 1.0) * D - 1.0) * 0.5
    z0f = jnp.floor(iz)
    fz = iz - z0f
    z0 = z0f.astype(jnp.int32)
    z1 = z0 + 1
    wz0 = jnp.where((z0 >= 0) & (z0 <= D - 1), 1.0 - fz, 0.0)
    wz1 = jnp.where(z1 <= D - 1, fz, 0.0)
    z0c = jnp.clip(z0, 0, D - 1).astype(jnp.int32)
    z1c = jnp.clip(z1, 0, D - 1).astype(jnp.int32)
    zidx = jnp.stack([z0c, z1c], axis=0)                          # (2, C) int32

    # Fold grid build + rotation*scale + translation + grid_sample
    # unnormalization into per-(b, c) affine coefficients:
    #   ix = ax*x + ay*y + a0 ,  iy = bx*x + by*y + b0   (pixel coords x, y).
    Wf, Hf = float(W), float(H)
    tx = trans[..., 0]
    ty = trans[..., 1]
    ax = cos_t * scale * (Wf / (Wf - 1.0))
    ay = -sin_t * scale * (Wf / (Hf - 1.0))
    a0 = ((sin_t - cos_t) * scale + tx) * (Wf * 0.5) + (Wf - 1.0) * 0.5
    bx = sin_t * scale * (Hf / (Wf - 1.0))
    by = cos_t * scale * (Hf / (Hf - 1.0))
    b0 = (-(sin_t + cos_t) * scale + ty) * (Hf * 0.5) + (Hf - 1.0) * 0.5
    wz0b = jnp.broadcast_to(wz0[None, :], (B, C))
    wz1b = jnp.broadcast_to(wz1[None, :], (B, C))
    # Long axis last -> tiny padded SMEM footprint even at production B*C.
    coef = jnp.stack([ax, ay, a0, bx, by, b0, wz0b, wz1b],
                     axis=0).reshape(8, B * C).astype(jnp.float32)  # (8, B*C)

    # Channel-block size: multiple of 8 or the full channel dim (tiling rule),
    # amortizing per-grid-step overhead over CBLK planes.
    CBLK = D if D <= 8 else (8 if D % 8 == 0 else D)

    kernel = functools.partial(_adaat_warp_kernel, H=H, W=W, C=C, CBLK=CBLK)
    fmap = feature_map.astype(jnp.float32)

    grid_spec = pltpu.PrefetchScalarGridSpec(
        num_scalar_prefetch=0,
        grid=(B, D // CBLK),
        in_specs=[
            pl.BlockSpec(memory_space=pltpu.MemorySpace.SMEM),    # coef (8, B*C)
            pl.BlockSpec(memory_space=pltpu.MemorySpace.SMEM),    # zidx (2, C)
            # Whole feature volume for this batch; same block index for every
            # channel-block step -> DMA'd from HBM only once per batch.
            pl.BlockSpec((None, D, H, W), lambda b, cb: (b, 0, 0, 0)),
        ],
        out_specs=pl.BlockSpec((None, CBLK, N), lambda b, cb: (b, cb, 0)),
    )

    out = pl.pallas_call(
        kernel,
        out_shape=jax.ShapeDtypeStruct((B, D, N), jnp.float32),
        grid_spec=grid_spec,
        compiler_params=pltpu.CompilerParams(
            dimension_semantics=("parallel", "parallel")),
    )(coef, zidx, fmap)
    return out.reshape(B, D, H, W)


def adaat_forward(feature_map, para_code, weights):
    B, D, H, W = feature_map.shape
    scale, angle, trans = param_head(para_code, weights)
    cos_t = jnp.cos(angle)
    sin_t = jnp.sin(angle)
    trans2 = trans.reshape(B, D, 2)
    return adaat_warp(feature_map, cos_t, sin_t, scale, trans2)


# ----------------------------------------------------------------------------
# Pure-JAX references (independent implementations, for correctness checks)
# ----------------------------------------------------------------------------
def param_head_reference(para_code, w):
    hp = jnp.maximum(
        jnp.dot(para_code, w["w_common"].T, precision=jax.lax.Precision.HIGHEST)
        + w["b_common"], 0.0)
    scale = jax.nn.sigmoid(
        jnp.dot(hp, w["w_scale"].T, precision=jax.lax.Precision.HIGHEST)
        + w["b_scale"]) * 2.0
    angle = jnp.tanh(
        jnp.dot(hp, w["w_rotation"].T, precision=jax.lax.Precision.HIGHEST)
        + w["b_rotation"]) * 3.14159
    trans = jnp.tanh(
        jnp.dot(hp, w["w_translation"].T, precision=jax.lax.Precision.HIGHEST)
        + w["b_translation"])
    return scale, angle, trans


def adaat_warp_reference(feature_map, cos_t, sin_t, scale, trans):
    """grid build + trilinear grid_sample (align_corners=False, zeros padding)."""
    B, D, H, W = feature_map.shape
    xs = 2.0 * jnp.arange(W, dtype=jnp.float32) / (W - 1.0) - 1.0
    ys = 2.0 * jnp.arange(H, dtype=jnp.float32) / (H - 1.0) - 1.0
    zs = 2.0 * jnp.arange(D, dtype=jnp.float32) / (D - 1.0) - 1.0
    gx = xs[None, None, None, :]
    gy = ys[None, None, :, None]
    gz = zs[None, :, None, None]
    c4 = lambda a: a[:, :, None, None]
    sx = (c4(cos_t) * gx - c4(sin_t) * gy) * c4(scale) + c4(trans[..., 0])
    sy = (c4(sin_t) * gx + c4(cos_t) * gy) * c4(scale) + c4(trans[..., 1])
    sz = jnp.broadcast_to(gz, (B, D, H, W))

    ix = ((sx + 1.0) * W - 1.0) * 0.5
    iy = ((sy + 1.0) * H - 1.0) * 0.5
    iz = ((sz + 1.0) * D - 1.0) * 0.5
    x0 = jnp.floor(ix); fx = ix - x0
    y0 = jnp.floor(iy); fy = iy - y0
    z0 = jnp.floor(iz); fz = iz - z0

    bidx = jnp.arange(B).reshape(B, 1, 1, 1)

    def corner(zc, yc, xc, wgt):
        valid = ((xc >= 0) & (xc <= W - 1) & (yc >= 0) & (yc <= H - 1) &
                 (zc >= 0) & (zc <= D - 1))
        xi = jnp.clip(xc, 0, W - 1).astype(jnp.int32)
        yi = jnp.clip(yc, 0, H - 1).astype(jnp.int32)
        zi = jnp.clip(zc, 0, D - 1).astype(jnp.int32)
        v = feature_map[bidx, zi, yi, xi]
        return jnp.where(valid, v, 0.0) * wgt

    out = jnp.zeros((B, D, H, W), jnp.float32)
    for zc, wz in ((z0, 1.0 - fz), (z0 + 1.0, fz)):
        for yc, wy in ((y0, 1.0 - fy), (y0 + 1.0, fy)):
            for xc, wx in ((x0, 1.0 - fx), (x0 + 1.0, fx)):
                out = out + corner(zc, yc, xc, wz * wy * wx)
    return out


def init_weights(key, para_ch, feature_ch):
    ks = jax.random.split(key, 8)

    def linear(kw, kb, fan_in, fan_out):
        bound = 1.0 / (fan_in ** 0.5)
        wgt = jax.random.uniform(kw, (fan_out, fan_in), jnp.float32, -bound, bound)
        b = jax.random.uniform(kb, (fan_out,), jnp.float32, -bound, bound)
        return wgt, b

    wc, bc = linear(ks[0], ks[1], para_ch, para_ch)
    ws, bs = linear(ks[2], ks[3], para_ch, feature_ch)
    wr, br = linear(ks[4], ks[5], para_ch, feature_ch)
    wt, bt = linear(ks[6], ks[7], para_ch, 2 * feature_ch)
    return {"w_common": wc, "b_common": bc,
            "w_scale": ws, "b_scale": bs,
            "w_rotation": wr, "b_rotation": br,
            "w_translation": wt, "b_translation": bt}


if __name__ == "__main__":
    key = jax.random.PRNGKey(0)
    B, PARA_CH, FEATURE_CH, H, W = 2, 32, 4, 16, 16

    k_f, k_p, k_w = jax.random.split(key, 3)
    feature_map = jax.random.normal(k_f, (B, FEATURE_CH, H, W), dtype=jnp.float32)
    para_code = jax.random.normal(k_p, (B, PARA_CH), dtype=jnp.float32)
    weights = init_weights(k_w, PARA_CH, FEATURE_CH)

    out = adaat_forward(feature_map, para_code, weights)
    out = jax.block_until_ready(out)
    assert out.shape == (B, FEATURE_CH, H, W)

    # Check 1: parameter-head kernel vs independent JAX reference.
    s_k, a_k, t_k = param_head(para_code, weights)
    s_r, a_r, t_r = param_head_reference(para_code, weights)
    assert float(jnp.max(jnp.abs(s_k - s_r))) < 2e-2
    assert float(jnp.max(jnp.abs(a_k - a_r))) < 2e-2
    assert float(jnp.max(jnp.abs(t_k - t_r))) < 2e-2

    # Check 2: warp kernel vs independent trilinear grid_sample reference driven
    # by the same per-channel parameters the kernel consumed.  Tolerance 3e-2
    # accommodates the bf16 MXU operands (f32 accumulation) in the kernel.
    ref_out = adaat_warp_reference(feature_map, jnp.cos(a_k), jnp.sin(a_k), s_k,
                                   t_k.reshape(B, FEATURE_CH, 2))
    assert float(jnp.max(jnp.abs(out - ref_out))) < 3e-2

    print("KERNEL_OK")
</pallas_src>

<mosaic_0001>
module attributes {stable_mosaic.version = 11 : i64} {
  func.func @_param_head_kernel(%arg0: memref<2x32xf32, #tpu.memory_space<vmem>>, %arg1: memref<32x32xf32, #tpu.memory_space<vmem>>, %arg2: memref<1x32xf32, #tpu.memory_space<vmem>>, %arg3: memref<32x4xf32, #tpu.memory_space<vmem>>, %arg4: memref<1x4xf32, #tpu.memory_space<vmem>>, %arg5: memref<32x4xf32, #tpu.memory_space<vmem>>, %arg6: memref<1x4xf32, #tpu.memory_space<vmem>>, %arg7: memref<32x8xf32, #tpu.memory_space<vmem>>, %arg8: memref<1x8xf32, #tpu.memory_space<vmem>>, %arg9: memref<2x4xf32, #tpu.memory_space<vmem>>, %arg10: memref<2x4xf32, #tpu.memory_space<vmem>>, %arg11: memref<2x8xf32, #tpu.memory_space<vmem>>) attributes {dimension_semantics = [], scalar_prefetch = 0 : i64, scratch_operands = 0 : i64, tpu.core_type = #tpu.core_type<tc>} {
    %c0 = arith.constant 0 : index
    %c0_0 = arith.constant 0 : index
    %0 = vector.load %arg0[%c0, %c0_0] : memref<2x32xf32, #tpu.memory_space<vmem>>, vector<2x32xf32>
    %c0_1 = arith.constant 0 : index
    %c0_2 = arith.constant 0 : index
    %1 = vector.load %arg1[%c0_1, %c0_2] : memref<32x32xf32, #tpu.memory_space<vmem>>, vector<32x32xf32>
    %cst = arith.constant dense<0.000000e+00> : vector<2x32xf32>
    %2 = tpu.matmul %0, %1, %cst {dimension_numbers = #tpu.dot_dimension_numbers<[1], [0], [0], [1], [0, 0, 1, 1], [], []>} : vector<2x32xf32>, vector<32x32xf32>, vector<2x32xf32> -> vector<2x32xf32>
    %c0_3 = arith.constant 0 : index
    %c0_4 = arith.constant 0 : index
    %3 = vector.load %arg2[%c0_3, %c0_4] : memref<1x32xf32, #tpu.memory_space<vmem>>, vector<1x32xf32>
    %4 = vector.broadcast %3 : vector<1x32xf32> to vector<2x32xf32>
    %5 = arith.addf %2, %4 : vector<2x32xf32>
    %cst_5 = arith.constant 0.000000e+00 : f32
    %6 = vector.broadcast %cst_5 : f32 to vector<2x32xf32>
    %7 = arith.maximumf %5, %6 : vector<2x32xf32>
    %c0_6 = arith.constant 0 : index
    %c0_7 = arith.constant 0 : index
    %8 = vector.load %arg3[%c0_6, %c0_7] : memref<32x4xf32, #tpu.memory_space<vmem>>, vector<32x4xf32>
    %cst_8 = arith.constant dense<0.000000e+00> : vector<2x4xf32>
    %9 = tpu.matmul %7, %8, %cst_8 {dimension_numbers = #tpu.dot_dimension_numbers<[1], [0], [0], [1], [0, 0, 1, 1], [], []>} : vector<2x32xf32>, vector<32x4xf32>, vector<2x4xf32> -> vector<2x4xf32>
    %c0_9 = arith.constant 0 : index
    %c0_10 = arith.constant 0 : index
    %10 = vector.load %arg4[%c0_9, %c0_10] : memref<1x4xf32, #tpu.memory_space<vmem>>, vector<1x4xf32>
    %11 = vector.broadcast %10 : vector<1x4xf32> to vector<2x4xf32>
    %12 = arith.addf %9, %11 : vector<2x4xf32>
    %cst_11 = arith.constant 0.000000e+00 : f32
    %13 = vector.broadcast %cst_11 : f32 to vector<2x4xf32>
    %14 = arith.subf %13, %12 : vector<2x4xf32>
    %15 = math.exp %14 : vector<2x4xf32>
    %cst_12 = arith.constant 1.000000e+00 : f32
    %16 = vector.broadcast %cst_12 : f32 to vector<2x4xf32>
    %17 = arith.addf %16, %15 : vector<2x4xf32>
    %cst_13 = arith.constant 2.000000e+00 : f32
    %18 = vector.broadcast %cst_13 : f32 to vector<2x4xf32>
    %19 = arith.divf %18, %17 : vector<2x4xf32>
    %c0_14 = arith.constant 0 : index
    %c0_15 = arith.constant 0 : index
    %20 = vector.load %arg9[%c0_14, %c0_15] : memref<2x4xf32, #tpu.memory_space<vmem>>, vector<2x4xf32>
    tpu.vector_store %arg9[%c0_14, %c0_15], %19 {strides = array<i32>} : memref<2x4xf32, #tpu.memory_space<vmem>>, vector<2x4xf32>,
    %c0_16 = arith.constant 0 : index
    %c0_17 = arith.constant 0 : index
    %21 = vector.load %arg5[%c0_16, %c0_17] : memref<32x4xf32, #tpu.memory_space<vmem>>, vector<32x4xf32>
    %cst_18 = arith.constant dense<0.000000e+00> : vector<2x4xf32>
    %22 = tpu.matmul %7, %21, %cst_18 {dimension_numbers = #tpu.dot_dimension_numbers<[1], [0], [0], [1], [0, 0, 1, 1], [], []>} : vector<2x32xf32>, vector<32x4xf32>, vector<2x4xf32> -> vector<2x4xf32>
    %c0_19 = arith.constant 0 : index
    %c0_20 = arith.constant 0 : index
    %23 = vector.load %arg6[%c0_19, %c0_20] : memref<1x4xf32, #tpu.memory_space<vmem>>, vector<1x4xf32>
    %24 = vector.broadcast %23 : vector<1x4xf32> to vector<2x4xf32>
    %25 = arith.addf %22, %24 : vector<2x4xf32>
    %26 = math.tanh %25 : vector<2x4xf32>
    %cst_21 = arith.constant 3.141590e+00 : f32
    %27 = vector.broadcast %cst_21 : f32 to vector<2x4xf32>
    %28 = arith.mulf %26, %27 : vector<2x4xf32>
    %c0_22 = arith.constant 0 : index
    %c0_23 = arith.constant 0 : index
    %29 = vector.load %arg10[%c0_22, %c0_23] : memref<2x4xf32, #tpu.memory_space<vmem>>, vector<2x4xf32>
    tpu.vector_store %arg10[%c0_22, %c0_23], %28 {strides = array<i32>} : memref<2x4xf32, #tpu.memory_space<vmem>>, vector<2x4xf32>,
    %c0_24 = arith.constant 0 : index
    %c0_25 = arith.constant 0 : index
    %30 = vector.load %arg7[%c0_24, %c0_25] : memref<32x8xf32, #tpu.memory_space<vmem>>, vector<32x8xf32>
    %cst_26 = arith.constant dense<0.000000e+00> : vector<2x8xf32>
    %31 = tpu.matmul %7, %30, %cst_26 {dimension_numbers = #tpu.dot_dimension_numbers<[1], [0], [0], [1], [0, 0, 1, 1], [], []>} : vector<2x32xf32>, vector<32x8xf32>, vector<2x8xf32> -> vector<2x8xf32>
    %c0_27 = arith.constant 0 : index
    %c0_28 = arith.constant 0 : index
    %32 = vector.load %arg8[%c0_27, %c0_28] : memref<1x8xf32, #tpu.memory_space<vmem>>, vector<1x8xf32>
    %33 = vector.broadcast %32 : vector<1x8xf32> to vector<2x8xf32>
    %34 = arith.addf %31, %33 : vector<2x8xf32>
    %35 = math.tanh %34 : vector<2x8xf32>
    %c0_29 = arith.constant 0 : index
    %c0_30 = arith.constant 0 : index
    %36 = vector.load %arg11[%c0_29, %c0_30] : memref<2x8xf32, #tpu.memory_space<vmem>>, vector<2x8xf32>
    tpu.vector_store %arg11[%c0_29, %c0_30], %35 {strides = array<i32>} : memref<2x8xf32, #tpu.memory_space<vmem>>, vector<2x8xf32>,
    return
  }
}

</mosaic_0001>

<llo_original>
// kernel: tpu_custom_call.1
$region0: #{tpu_custom_call.1}
  #allocation0 [shape = 'u32[]', space=smem, size = 0x4, offset = 0x4, fixed_abs, tag = 'smem constant byte address 0x4 - core index']
  #allocation1 [shape = 'u32[72,128]{1,0:T(1,128)}', space=vmem, size = 0x9000, scoped, tag = 'internal scratch']
  %s0 = inlined_call_operand.vmem [shape: f32[2,32], index: 0, kind: input, shape index: {}]
  %s1 = inlined_call_operand.vmem [shape: f32[32,32], index: 1, kind: input, shape index: {}]
  %s2 = inlined_call_operand.vmem [shape: f32[1,32], index: 2, kind: input, shape index: {}]
  %s3 = inlined_call_operand.vmem [shape: f32[32,4], index: 3, kind: input, shape index: {}]
  %s4 = inlined_call_operand.vmem [shape: f32[1,4], index: 4, kind: input, shape index: {}]
  %s5 = inlined_call_operand.vmem [shape: f32[32,4], index: 5, kind: input, shape index: {}]
  %s6 = inlined_call_operand.vmem [shape: f32[1,4], index: 6, kind: input, shape index: {}]
  %s7 = inlined_call_operand.vmem [shape: f32[32,8], index: 7, kind: input, shape index: {}]
  %s8 = inlined_call_operand.vmem [shape: f32[1,8], index: 8, kind: input, shape index: {}]
  %s9 = inlined_call_operand.hbm [shape: f32[2,4], index: 9, kind: output, shape index: {0}]
  %s10 = inlined_call_operand.hbm [shape: f32[2,4], index: 10, kind: output, shape index: {1}]
  %s11 = inlined_call_operand.hbm [shape: f32[2,8], index: 11, kind: output, shape index: {2}]
  %12 = xla_tuple %s9, %s10, %s11
  %s13 = sld [smem:[#allocation0]]
  $region62: #{tpu_custom_call.1} parent=0
    _
  %s15 = ssub.s32 1, %s13
  %s16 = scalar_select 0, %s15, %s13
  $region1: #{tpu_custom_call.1} parent=0
    #allocation2 [shape = 'u8[1024]{0}', space=vmem, size = 0x400, scoped, tag = 'output window, operand 0, single buffered']
    #allocation3 [shape = 's32[1]{0}', space=sflag, size = 0x4, scoped, tag = 'scoped memory for tpu_custom_call.1']
    #allocation4 [shape = 'u8[1024]{0}', space=vmem, size = 0x400, scoped, tag = 'output window, operand 1, single buffered']
    #allocation5 [shape = 's32[1]{0}', space=sflag, size = 0x4, scoped, tag = 'scoped memory for tpu_custom_call.1']
    #allocation6 [shape = 'u8[1024]{0}', space=vmem, size = 0x400, scoped, tag = 'output window, operand 2, single buffered']
    %17 = vsyncpa [#allocation3], 0
    %18 = vsyncpa [#allocation5], 0
    // Predicated region
    $region2: #{tpu_custom_call.1} parent=1 // pred_check
      _
    $region3: #{tpu_custom_call.1} parent=1 // pred_check_branch
      %20 = sbr.rel (0) target = $region5
    $region4: #{tpu_custom_call.1} parent=1 // pred_region
      _
    $region5: #{tpu_custom_call.1} parent=1 // pred_fallthru
      _
    // Predicated region
    $region6: #{tpu_custom_call.1} parent=1 // pred_check
      _
    $region7: #{tpu_custom_call.1} parent=1 // pred_check_branch
      %22 = sbr.rel (0) target = $region9
    $region8: #{tpu_custom_call.1} parent=1 // pred_region
      _
    $region9: #{tpu_custom_call.1} parent=1 // pred_fallthru
      _
    // Predicated region
    $region10: #{tpu_custom_call.1} parent=1 // pred_check
      _
    $region11: #{tpu_custom_call.1} parent=1 // pred_check_branch
      %24 = sbr.rel (0) target = $region13
    $region12: #{tpu_custom_call.1} parent=1 // pred_region
      _
    $region13: #{tpu_custom_call.1} parent=1 // pred_fallthru
      _
    // Predicated region
    $region14: #{tpu_custom_call.1} parent=1 // pred_check
      _
    $region15: #{tpu_custom_call.1} parent=1 // pred_check_branch
      %26 = sbr.rel (0) target = $region17
    $region16: #{tpu_custom_call.1} parent=1 // pred_region
      _
    $region17: #{tpu_custom_call.1} parent=1 // pred_fallthru
      _
    // Predicated region
    $region18: #{tpu_custom_call.1} parent=1 // pred_check
      _
    $region19: #{tpu_custom_call.1} parent=1 // pred_check_branch
      %28 = sbr.rel (0) target = $region21
    $region20: #{tpu_custom_call.1} parent=1 // pred_region
      _
    $region21: #{tpu_custom_call.1} parent=1 // pred_fallthru
      _
    // Predicated region
    $region22: #{tpu_custom_call.1} parent=1 // pred_check
      _
    $region23: #{tpu_custom_call.1} parent=1 // pred_check_branch
      %30 = sbr.rel (0) target = $region25
    $region24: #{tpu_custom_call.1} parent=1 // pred_region
      _
    $region25: #{tpu_custom_call.1} parent=1 // pred_fallthru
      _
    // Predicated region
    $region26: #{tpu_custom_call.1} parent=1 // pred_check
      _
    $region27: #{tpu_custom_call.1} parent=1 // pred_check_branch
      %32 = sbr.rel (0) target = $region29
    $region28: #{tpu_custom_call.1} parent=1 // pred_region
      _
    $region29: #{tpu_custom_call.1} parent=1 // pred_fallthru
      _
    // Predicated region
    $region30: #{tpu_custom_call.1} parent=1 // pred_check
      _
    $region31: #{tpu_custom_call.1} parent=1 // pred_check_branch
      %34 = sbr.rel (0) target = $region33
    $region32: #{tpu_custom_call.1} parent=1 // pred_region
      _
    $region33: #{tpu_custom_call.1} parent=1 // pred_fallthru
      _
    // Predicated region
    $region34: #{tpu_custom_call.1} parent=1 // pred_check
      _
    $region35: #{tpu_custom_call.1} parent=1 // pred_check_branch
      %36 = sbr.rel (0) target = $region37
    $region36: #{tpu_custom_call.1} parent=1 // pred_region
      _
    $region37: #{tpu_custom_call.1} parent=1 // pred_fallthru
      _
    %v37 = vld [vmem:[%s0] sm:$0x3]
    %v38 = vld [vmem:[%s1] sm:$0xff]
    %v39 = vld [vmem:[%s1 + $0x8] sm:$0xff]
    %v40 = vld [vmem:[%s1 + $0x10] sm:$0xff]
    %v41 = vld [vmem:[%s1 + $0x18] sm:$0xff]
    %v42 = vld [vmem:[%s2] sm:$0x1]
    %v44 = vperm.slane %v42, 0
    %vm46 = vcmask 261120
    %v48 = vsel %vm46, %v37, 0
    %50 = vmatpush.msra.mxu0 0.0
    %51 = vmatpush.msra.mxu0 0.0
    %52 = vmatpush.msra.mxu0 0.0
    %53 = vmatpush.msra.mxu0 0.0
    %54 = vmatpush.msra.mxu0 0.0
    %55 = vmatpush.msra.mxu0 0.0
    %56 = vmatpush.msra.mxu0 0.0
    %57 = vmatpush.msra.mxu0 0.0
    %58 = vmatpush.msra.mxu0 0.0
    %59 = vmatpush.msra.mxu0 0.0
    %60 = vmatpush.msra.mxu0 0.0
    %61 = vmatpush.msra.mxu0 0.0
    %62 = vmatpush.msra.mxu0 %v41
    %63 = vmatpush.msra.mxu0 %v40
    %64 = vmatpush.msra.mxu0 %v39
    %65 = vmatpush.msra.mxu0 %v38
    %66 = vmatmul.f32.gmra.mxu0 %v48
    %v67 = vpop.f32.mrf.mxu0
    %v68 = vadd.f32 %v44, %v67
    %69 = vdwg.mxu0
    %v70 = vmax.f32 %v68, 0.0
    %v71 = vld [vmem:[%s3] sm:$0xff]
    %v72 = vld [vmem:[%s3 + $0x8] sm:$0xff]
    %v73 = vld [vmem:[%s3 + $0x10] sm:$0xff]
    %v74 = vld [vmem:[%s3 + $0x18] sm:$0xff]
    %v75 = vld [vmem:[%s4] sm:$0x1]
    %v77 = vperm.slane %v75, 0
    %v80 = vsel %vm46, %v70, 0
    %82 = vmatpush.msra.mxu0 0.0
    %83 = vmatpush.msra.mxu0 0.0
    %84 = vmatpush.msra.mxu0 0.0
    %85 = vmatpush.msra.mxu0 0.0
    %86 = vmatpush.msra.mxu0 0.0
    %87 = vmatpush.msra.mxu0 0.0
    %88 = vmatpush.msra.mxu0 0.0
    %89 = vmatpush.msra.mxu0 0.0
    %90 = vmatpush.msra.mxu0 0.0
    %91 = vmatpush.msra.mxu0 0.0
    %92 = vmatpush.msra.mxu0 0.0
    %93 = vmatpush.msra.mxu0 0.0
    %94 = vmatpush.msra.mxu0 %v74
    %95 = vmatpush.msra.mxu0 %v73
    %96 = vmatpush.msra.mxu0 %v72
    %97 = vmatpush.msra.mxu0 %v71
    %98 = vmatmul.f32.gmra.mxu0 %v80
    %v99 = vpop.f32.mrf.mxu0
    %v100 = vadd.f32 %v77, %v99
    %101 = vdwg.mxu0
    %v102 = vsub.f32 0.0, %v100
    %v103 = vmul.f32 %v102, 1.442695
    %v104 = vpow.pop %v103
    %v105 = vadd.f32 %v104, 1.0
    %v106 = vrcp.pop %v105
    %v107 = vmul.f32 %v105, %v106
    %v108 = vsub.f32 1.0, %v107
    %v109 = vmul.f32 %v106, %v108
    %v110 = vadd.f32 %v106, %v109
    %vm111 = vweird.f32 %v105
    %vm112 = vweird.f32 %v106
    %vm113 = vmor %vm111, %vm112
    %v114 = vsel %vm113, %v106, %v110
    %v115 = vand.u32 2147483647, %v105
    %vm116 = vcmp.eq.f32.partialorder %v115, 8.507059e+37
    %v117 = vand.u32 %v105, 2147483648
    %v118 = vor.u32 1.1754944e-38, %v117
    %v119 = vsel %vm116, %v118, %v114
    %v120 = vmul.f32 2.0, %v119
    %vm121 = vcmask 25600
    %122 = vst.msk [vmem:[#allocation2] sm:$0x3] %vm121, %v120
    %v123 = vld [vmem:[%s5] sm:$0xff]
    %v124 = vld [vmem:[%s5 + $0x8] sm:$0xff]
    %v125 = vld [vmem:[%s5 + $0x10] sm:$0xff]
    %v126 = vld [vmem:[%s5 + $0x18] sm:$0xff]
    %v127 = vld [vmem:[%s6] sm:$0x1]
    %v129 = vperm.slane %v127, 0
    %131 = vmatpush.msra.mxu0 0.0
    %132 = vmatpush.msra.mxu0 0.0
    %133 = vmatpush.msra.mxu0 0.0
    %134 = vmatpush.msra.mxu0 0.0
    %135 = vmatpush.msra.mxu0 0.0
    %136 = vmatpush.msra.mxu0 0.0
    %137 = vmatpush.msra.mxu0 0.0
    %138 = vmatpush.msra.mxu0 0.0
    %139 = vmatpush.msra.mxu0 0.0
    %140 = vmatpush.msra.mxu0 0.0
    %141 = vmatpush.msra.mxu0 0.0
    %142 = vmatpush.msra.mxu0 0.0
    %143 = vmatpush.msra.mxu0 %v126
    %144 = vmatpush.msra.mxu0 %v125
    %145 = vmatpush.msra.mxu0 %v124
    %146 = vmatpush.msra.mxu0 %v123
    %147 = vmatmul.f32.gmra.mxu0 %v80
    %v148 = vpop.f32.mrf.mxu0
    %v149 = vadd.f32 %v129, %v148
    %150 = vdwg.mxu0
    %v151 = vtanh.pop %v149
    %v152 = vmul.f32 %v151, 3.14159
    %153 = vst.msk [vmem:[#allocation4] sm:$0x3] %vm121, %v152
    %v154 = vld [vmem:[%s7] sm:$0xff]
    %v155 = vld [vmem:[%s7 + $0x8] sm:$0xff]
    %v156 = vld [vmem:[%s7 + $0x10] sm:$0xff]
    %v157 = vld [vmem:[%s7 + $0x18] sm:$0xff]
    %v158 = vld [vmem:[%s8] sm:$0x1]
    %v160 = vperm.slane %v158, 0
    %162 = vmatpush.msra.mxu0 0.0
    %163 = vmatpush.msra.mxu0 0.0
    %164 = vmatpush.msra.mxu0 0.0
    %165 = vmatpush.msra.mxu0 0.0
    %166 = vmatpush.msra.mxu0 0.0
    %167 = vmatpush.msra.mxu0 0.0
    %168 = vmatpush.msra.mxu0 0.0
    %169 = vmatpush.msra.mxu0 0.0
    %170 = vmatpush.msra.mxu0 0.0
    %171 = vmatpush.msra.mxu0 0.0
    %172 = vmatpush.msra.mxu0 0.0
    %173 = vmatpush.msra.mxu0 0.0
    %174 = vmatpush.msra.mxu0 %v157
    %175 = vmatpush.msra.mxu0 %v156
    %176 = vmatpush.msra.mxu0 %v155
    %177 = vmatpush.msra.mxu0 %v154
    %178 = vmatmul.f32.gmra.mxu0 %v80
    %v179 = vpop.f32.mrf.mxu0
    %v180 = vadd.f32 %v160, %v179
    %181 = vdwg.mxu0
    %v182 = vtanh.pop %v180
    %vm183 = vcmask 58368
    %184 = vst.msk [vmem:[#allocation6] sm:$0x3] %vm183, %v182
    // Predicated region
    $region38: #{tpu_custom_call.1} parent=1 // pred_check
      _
    $region39: #{tpu_custom_call.1} parent=1 // pred_check_branch
      %186 = sbr.rel (0) target = $region41
    $region40: #{tpu_custom_call.1} parent=1 // pred_region
      %188 = vsyncadd [#allocation3], 0
      %s190 = sshll.u32 [#allocation2], 4
      %s191 = int_to_ptr.vmem [resolvable:$true] %s190
      %s192 = sshll.u32 %s9, 4
      %s193 = int_to_ptr.hbm [resolvable:$true] %s192
      %195 = dma.vmem_to_hbm [thread:$0]  %s191, 32, %s193, [#allocation3]
    $region41: #{tpu_custom_call.1} parent=1 // pred_fallthru
      _
    // Predicated region
    $region42: #{tpu_custom_call.1} parent=1 // pred_check
      _
    $region43: #{tpu_custom_call.1} parent=1 // pred_check_branch
      %197 = sbr.rel (0) target = $region45
    $region44: #{tpu_custom_call.1} parent=1 // pred_region
      %199 = vsyncadd [#allocation5], 0
      %s201 = sshll.u32 [#allocation4], 4
      %s202 = int_to_ptr.vmem [resolvable:$true] %s201
      %s203 = sshll.u32 %s10, 4
      %s204 = int_to_ptr.hbm [resolvable:$true] %s203
      %206 = dma.vmem_to_hbm [thread:$0]  %s202, 32, %s204, [#allocation5]
    $region45: #{tpu_custom_call.1} parent=1 // pred_fallthru
      _
    // Predicated region
    $region46: #{tpu_custom_call.1} parent=1 // pred_check
      _
    $region47: #{tpu_custom_call.1} parent=1 // pred_check_branch
      %208 = sbr.rel (0) target = $region49
    $region48: #{tpu_custom_call.1} parent=1 // pred_region
      %210 = vsyncadd [#allocation5], 0
      %s212 = sshll.u32 [#allocation6], 4
      %s213 = int_to_ptr.vmem [resolvable:$true] %s212
      %s214 = sshll.u32 %s11, 4
      %s215 = int_to_ptr.hbm [resolvable:$true] %s214
      %217 = dma.vmem_to_hbm [thread:$0]  %s213, 32, %s215, [#allocation5]
    $region49: #{tpu_custom_call.1} parent=1 // pred_fallthru
      _
    // Predicated region
    $region50: #{tpu_custom_call.1} parent=1 // pred_check
      _
    $region51: #{tpu_custom_call.1} parent=1 // pred_check_branch
      %219 = sbr.rel (0) target = $region53
    $region52: #{tpu_custom_call.1} parent=1 // pred_region
      %221 = dma.done [#allocation3], 32
    $region53: #{tpu_custom_call.1} parent=1 // pred_fallthru
      _
    // Predicated region
    $region54: #{tpu_custom_call.1} parent=1 // pred_check
      _
    $region55: #{tpu_custom_call.1} parent=1 // pred_check_branch
      %223 = sbr.rel (0) target = $region57
    $region56: #{tpu_custom_call.1} parent=1 // pred_region
      %225 = dma.done [#allocation5], 32
    $region57: #{tpu_custom_call.1} parent=1 // pred_fallthru
      _
    // Predicated region
    $region58: #{tpu_custom_call.1} parent=1 // pred_check
      _
    $region59: #{tpu_custom_call.1} parent=1 // pred_check_branch
      %227 = sbr.rel (0) target = $region61
    $region60: #{tpu_custom_call.1} parent=1 // pred_region
      %229 = dma.done [#allocation5], 32
    $region61: #{tpu_custom_call.1} parent=1 // pred_fallthru
      _
    %230 = vsyncpa [#allocation3], 1
    %231 = vsyncpa [#allocation5], 1

</llo_original>
